<compile_context>
chip_gen: v7x
topology: tpu7x:2x2x1
jax: 0.10.0
libtpu: 0.0.40
codegen_flags: <defaults>
</compile_context>

<pallas_src>
import functools

import jax
import jax.numpy as jnp
from jax.experimental import pallas as pl
from jax.experimental.pallas import tpu as pltpu


def _local_conv_kernel(lhs_ref, w_ref, b_ref, o_ref):
    """One grid step = one (band, M-tile) pair.

    lhs_ref: (tm, Kpad)   bf16  lane-dense im2col rows for this band / M tile
    w_ref:   (Kpad, Npad) bf16  this band's filters as one fused-K slab
    b_ref:   (1, Npad)    f32   this band's bias (zero-padded to Npad)
    o_ref:   (tm, Npad)   f32   lane-dense output tile
    """
    o_ref[...] = (
        jnp.dot(lhs_ref[...], w_ref[...], preferred_element_type=jnp.float32)
        + b_ref[...]
    )


def _round_up(x, m):
    return ((x + m - 1) // m) * m


def _choose_tm(m_total, num_rows, cap=512):
    """M tile: <= cap rows, multiple of 8, and grid depth >= ~8 steps."""
    min_blocks = max(1, -(-8 // num_rows))                  # ceil(8 / R)
    tm = min(cap, m_total, -(-m_total // min_blocks))
    return max(8, _round_up(tm, 8))


def local_conv2d(x, weight, bias, *, num_rows, kernel=1, padding=0,
                 operand_dtype=jnp.bfloat16):
    """x: (b, c, h, w) NCHW. weight: (out_ch*num_rows, c, k, k). bias: (out_ch*num_rows,).

    Note: operands are cast to `operand_dtype` (bf16 by default) with f32
    accumulation; pass jnp.float32 if bit-fidelity with the f32 module matters.
    """
    b, c, h, w = x.shape
    k, p, R = kernel, padding, num_rows
    assert h % R == 0, "height must be divisible by num_rows"
    # The module's final reshape to (b, out_ch, h, w) implicitly requires
    # out_h == t and out_w == w (stride 1), i.e. a 'same'-size conv.
    assert k == 2 * p + 1, "LocalConv2d reshape requires kernel == 2*padding + 1"
    t = h // R
    out_ch = weight.shape[0] // R

    # --- glue: zero-pad, channel-last, overlapping bands ---------------------
    if p:
        x = jnp.pad(x, ((0, 0), (0, 0), (p, p), (p, p)))
    Hp, Wp = t + 2 * p, w + 2 * p
    out_h, out_w = Hp - k + 1, Wp - k + 1                    # == t, w

    x_nhwc = jnp.transpose(x, (0, 2, 3, 1))                  # (b, h+2p, w+2p, c)
    bands = jnp.stack([x_nhwc[:, r * t:r * t + Hp] for r in range(R)], axis=0)
    # tap-major / channel-minor K ordering: (R, b, out_h, out_w, k*k, c)
    patches = jnp.stack(
        [bands[:, :, di:di + out_h, dj:dj + out_w, :]
         for di in range(k) for dj in range(k)],
        axis=-2)

    K = c * k * k
    M = b * out_h * out_w
    N = out_ch
    Kpad = _round_up(K, 128)
    Npad = _round_up(N, 128)
    tm = _choose_tm(M, R)
    Mpad = _round_up(M, tm)
    n_m = Mpad // tm

    # lane-dense bf16 im2col LHS, zero-padded in K and M (padding contributes 0)
    lhs = patches.reshape(R, M, K)
    lhs = jnp.pad(lhs, ((0, 0), (0, Mpad - M), (0, Kpad - K))).astype(operand_dtype)

    # weights: (R*N, c, k, k) -> (R, kh, kw, c, N) -> (R, K, N), same K ordering
    wt = weight.reshape(R, N, c, k, k).transpose(0, 3, 4, 2, 1).reshape(R, K, N)
    wt = jnp.pad(wt, ((0, 0), (0, Kpad - K), (0, Npad - N))).astype(operand_dtype)
    bs = jnp.pad(bias.reshape(R, 1, N).astype(jnp.float32),
                 ((0, 0), (0, 0), (0, Npad - N)))            # (R, 1, Npad)

    y = pl.pallas_call(
        _local_conv_kernel,
        out_shape=jax.ShapeDtypeStruct((R, Mpad, Npad), jnp.float32),
        grid=(R, n_m),
        in_specs=[
            pl.BlockSpec((None, tm, Kpad), lambda r, m: (r, m, 0)),
            # index_map independent of m -> band weights DMA'd once, stay resident
            pl.BlockSpec((None, Kpad, Npad), lambda r, m: (r, 0, 0)),
            pl.BlockSpec((None, 1, Npad), lambda r, m: (r, 0, 0)),
        ],
        out_specs=pl.BlockSpec((None, tm, Npad), lambda r, m: (r, m, 0)),
        compiler_params=pltpu.CompilerParams(
            dimension_semantics=("parallel", "parallel"),
            vmem_limit_bytes=32 * 1024 * 1024,
        ),
    )(lhs, wt, bs)

    # --- glue: drop M/N padding and stitch bands back along height -----------
    y = y[:, :M, :N].reshape(R, b, out_h, out_w, N)
    y = jnp.transpose(y, (1, 4, 0, 2, 3)).reshape(b, N, R * out_h, out_w)
    return y                                                  # (b, out_ch, h, w)


def _reference(x, weight, bias, *, num_rows, kernel=1, padding=0):
    """Pure-JAX replica of the PyTorch forward (grouped conv path) for checking."""
    b, c, h, w = x.shape
    R, k, p = num_rows, kernel, padding
    t = h // R
    out_ch = weight.shape[0] // R
    if p:
        x = jnp.pad(x, ((0, 0), (0, 0), (p, p), (p, p)))
    Hp, Wp = t + 2 * p, w + 2 * p
    bands = jnp.stack([x[:, :, r * t:r * t + Hp, :] for r in range(R)], axis=1)
    xr = bands.reshape(b, R * c, Hp, Wp)
    y = jax.lax.conv_general_dilated(
        xr, weight, window_strides=(1, 1), padding="VALID",
        dimension_numbers=("NCHW", "OIHW", "NCHW"),
        feature_group_count=R, precision=jax.lax.Precision.HIGHEST)
    y = y + bias[None, :, None, None]
    out_h, out_w = Hp - k + 1, Wp - k + 1
    y = y.reshape(b, R, out_ch, out_h, out_w).transpose(0, 2, 1, 3, 4)
    return y.reshape(b, out_ch, R * out_h, out_w)


if __name__ == "__main__":
    # module config (LocalConv2d(num_rows=4, 4, 8, kernel=3, padding=1))
    num_rows, c_in, c_out, kernel, padding = 4, 4, 8, 3, 1
    b, h, w = 2, 16, 16

    key = jax.random.PRNGKey(0)
    kx, kw_, kb = jax.random.split(key, 3)
    x = jax.random.normal(kx, (b, c_in, h, w), dtype=jnp.float32)
    weight = 0.1 * jax.random.normal(
        kw_, (c_out * num_rows, c_in, kernel, kernel), dtype=jnp.float32)
    bias = 0.1 * jax.random.normal(kb, (c_out * num_rows,), dtype=jnp.float32)

    fn = jax.jit(functools.partial(
        local_conv2d, num_rows=num_rows, kernel=kernel, padding=padding))
    y = fn(x, weight, bias)
    jax.block_until_ready(y)

    # reference with the same bf16-rounded operands (kernel accumulates in f32)
    xq = x.astype(jnp.bfloat16).astype(jnp.float32)
    wq = weight.astype(jnp.bfloat16).astype(jnp.float32)
    y_ref = _reference(xq, wq, bias, num_rows=num_rows, kernel=kernel, padding=padding)

    assert y.shape == (b, c_out, h, w), y.shape
    err = float(jnp.max(jnp.abs(y - y_ref)))
    assert jnp.allclose(y, y_ref, atol=2e-3, rtol=2e-3), err

    print("KERNEL_OK")
</pallas_src>

<mosaic_0001>
module attributes {stable_mosaic.version = 11 : i64} {
  func.func @_local_conv_kernel(%arg0: i32, %arg1: i32, %arg2: memref<1x64x128xbf16, #tpu.memory_space<vmem>>, %arg3: memref<1x128x128xbf16, #tpu.memory_space<vmem>>, %arg4: memref<1x1x128xf32, #tpu.memory_space<vmem>>, %arg5: memref<1x64x128xf32, #tpu.memory_space<vmem>>) attributes {dimension_semantics = [#tpu.dimension_semantics<parallel>, #tpu.dimension_semantics<parallel>], iteration_bounds = array<i64: 4, 2>, scalar_prefetch = 0 : i64, scratch_operands = 0 : i64, tpu.core_type = #tpu.core_type<tc>, window_params = [{transform_indices = @transform_0, window_bounds = array<i64: 1, 64, 128>}, {transform_indices = @transform_1, window_bounds = array<i64: 1, 128, 128>}, {transform_indices = @transform_2, window_bounds = array<i64: 1, 1, 128>}, {transform_indices = @transform_3, window_bounds = array<i64: 1, 64, 128>}]} {
    %c0 = arith.constant 0 : index
    %c0_0 = arith.constant 0 : index
    %c0_1 = arith.constant 0 : index
    %0 = vector.load %arg2[%c0, %c0_0, %c0_1] : memref<1x64x128xbf16, #tpu.memory_space<vmem>>, vector<1x64x128xbf16>
    %1 = vector.shape_cast %0 : vector<1x64x128xbf16> to vector<64x128xbf16>
    %c0_2 = arith.constant 0 : index
    %c0_3 = arith.constant 0 : index
    %c0_4 = arith.constant 0 : index
    %2 = vector.load %arg3[%c0_2, %c0_3, %c0_4] : memref<1x128x128xbf16, #tpu.memory_space<vmem>>, vector<1x128x128xbf16>
    %3 = vector.shape_cast %2 : vector<1x128x128xbf16> to vector<128x128xbf16>
    %cst = arith.constant dense<0.000000e+00> : vector<64x128xf32>
    %4 = tpu.matmul %1, %3, %cst {dimension_numbers = #tpu.dot_dimension_numbers<[1], [0], [0], [1], [0, 0, 1, 1], [], []>} : vector<64x128xbf16>, vector<128x128xbf16>, vector<64x128xf32> -> vector<64x128xf32>
    %c0_5 = arith.constant 0 : index
    %c0_6 = arith.constant 0 : index
    %c0_7 = arith.constant 0 : index
    %5 = vector.load %arg4[%c0_5, %c0_6, %c0_7] : memref<1x1x128xf32, #tpu.memory_space<vmem>>, vector<1x1x128xf32>
    %6 = vector.shape_cast %5 : vector<1x1x128xf32> to vector<1x128xf32>
    %7 = vector.broadcast %6 : vector<1x128xf32> to vector<64x128xf32>
    %8 = arith.addf %4, %7 : vector<64x128xf32>
    %c0_8 = arith.constant 0 : index
    %c0_9 = arith.constant 0 : index
    %c0_10 = arith.constant 0 : index
    %9 = vector.load %arg5[%c0_8, %c0_9, %c0_10] : memref<1x64x128xf32, #tpu.memory_space<vmem>>, vector<1x64x128xf32>
    %10 = vector.shape_cast %9 : vector<1x64x128xf32> to vector<64x128xf32>
    %11 = vector.shape_cast %8 : vector<64x128xf32> to vector<1x64x128xf32>
    tpu.vector_store %arg5[%c0_8, %c0_9, %c0_10], %11 {strides = array<i32>} : memref<1x64x128xf32, #tpu.memory_space<vmem>>, vector<1x64x128xf32>,
    return
  }
  func.func @transform_0(%arg0: i32, %arg1: i32) -> (i32, i32, i32) {
    %c0_i32 = arith.constant 0 : i32
    %c0_i32_0 = arith.constant 0 : i32
    return %arg0, %arg1, %c0_i32 : i32, i32, i32
  }
  func.func @transform_1(%arg0: i32, %arg1: i32) -> (i32, i32, i32) {
    %c0_i32 = arith.constant 0 : i32
    %c0_i32_0 = arith.constant 0 : i32
    %c0_i32_1 = arith.constant 0 : i32
    return %arg0, %c0_i32, %c0_i32_0 : i32, i32, i32
  }
  func.func @transform_2(%arg0: i32, %arg1: i32) -> (i32, i32, i32) {
    %c0_i32 = arith.constant 0 : i32
    %c0_i32_0 = arith.constant 0 : i32
    %c0_i32_1 = arith.constant 0 : i32
    return %arg0, %c0_i32, %c0_i32_0 : i32, i32, i32
  }
  func.func @transform_3(%arg0: i32, %arg1: i32) -> (i32, i32, i32) {
    %c0_i32 = arith.constant 0 : i32
    %c0_i32_0 = arith.constant 0 : i32
    return %arg0, %arg1, %c0_i32 : i32, i32, i32
  }
}

</mosaic_0001>

<llo_original>
// kernel: local_conv2d.1
$region0: #{local_conv2d.1}
  #allocation0 [shape = 'u32[]', space=smem, size = 0x4, offset = 0x4, fixed_abs, tag = 'smem constant byte address 0x4 - core index']
  #allocation1 [shape = 'u32[144,128]{1,0:T(1,128)}', space=vmem, size = 0x12000, scoped, tag = 'internal scratch']
  %s0 = inlined_call_operand.vmem [shape: bf16[4,128,128], index: 0, kind: input, shape index: {}]
  %s1 = inlined_call_operand.vmem [shape: bf16[4,128,128], index: 1, kind: input, shape index: {}]
  %s2 = inlined_call_operand.vmem [shape: f32[4,1,128], index: 2, kind: input, shape index: {}]
  %s3 = inlined_call_operand.vmem [shape: f32[4,128,128], index: 3, kind: output, shape index: {}]
  %s4 = sld [smem:[#allocation0]]
  $region45: #{local_conv2d.1} parent=0
    _
  %s6 = ssub.s32 1, %s4
  %s7 = scalar_select 0, %s6, %s4
  loop: start=0, step=1, limit=10
  $region2: #{local_conv2d.1} parent=0 // loop_pre_header
    _
  $region3: #{local_conv2d.1} parent=0 // loop_header
    %s9 = sphi 0, %s13
    %p10 = scmp.ge.s32.totalorder %s9, 10
    %s16 = sphi 0, %s28
    %s17 = sphi 0, %s24
    %s18 = sphi 0, %s16
    %s19 = sphi 0, %s17
    %s20 = sphi 0, %s18
    %s21 = sphi 0, %s19
    %s33 = sphi 0, %s35
    %s36 = sphi 0, %s33
    %s37 = sphi 0, %s36
    %s53 = sphi 0, %s37
    %s59 = sphi 0, %s61
    %s62 = sphi 0, %s59
    %s63 = sphi 0, %s62
    %s79 = sphi 0, %s63
    %s85 = sphi 0, %s87
    %s88 = sphi 0, %s85
    %s89 = sphi 0, %s88
    %s105 = sphi 0, %s89
    %s113 = sphi 0, %s115
    %s116 = sphi 0, %s113
    %s117 = sphi 0, %s116
    %s133 = sphi 0, %s117
  $region4: #{local_conv2d.1} parent=0 // loop_header_branch
    %12 = sbr.rel (%p10) target = $region8
  $region5: #{local_conv2d.1} parent=0 // loop_body
    %s14 = ssub.s32 %s9, 1
    %s15 = ssub.s32 %s9, 2
    %s22 = sadd.s32 1, %s17
    %p23 = scmp.ge.s32.totalorder %s22, 2
    %s24 = scalar_select %p23, 0, %s22
    %s25 = sadd.s32 1, %s16
    %s26 = scalar_select %p23, %s25, %s16
    %p27 = scmp.ge.s32.totalorder %s26, 4
    %s28 = scalar_select %p27, 0, %s26
    %s29 = ssub.s32 %s16, %s28
    %s30 = ssub.s32 %s17, %s24
    %s31 = sor.u32 %s29, %s30
    %p32 = scmp.eq.s32.totalorder %s31, 0
    %s34 = sadd.s32 %s33, 1
    %s35 = scalar_select %p32, %s33, %s34
    %p38 = pneg %p32
    %p39 = scmp.eq.s32.totalorder %s9, 7
    %p40 = por %p38, %p39
    %p41 = scmp.ne.s32.totalorder %s33, %s36
    %p42 = scmp.eq.s32.totalorder %s9, 0
    %p43 = por %p41, %p42
    %p44 = scmp.ne.s32.totalorder %s33, %s36
    %p45 = scmp.eq.s32.totalorder %s14, 7
    %p46 = por %p44, %p45
    %p47 = scmp.ne.s32.totalorder %s36, %s37
    %p48 = scmp.eq.s32.totalorder %s14, 0
    %p49 = por %p47, %p48
    %p50 = scmp.ne.s32.totalorder %s36, %s37
    %p51 = scmp.eq.s32.totalorder %s15, 7
    %p52 = por %p50, %p51
    %p54 = scmp.ne.s32.totalorder %s37, %s53
    %p55 = scmp.eq.s32.totalorder %s15, 0
    %p56 = por %p54, %p55
    %s57 = ssub.s32 %s16, %s28
    %p58 = scmp.eq.s32.totalorder %s57, 0
    %s60 = sadd.s32 %s59, 1
    %s61 = scalar_select %p58, %s59, %s60
    %p64 = pneg %p58
    %p65 = scmp.eq.s32.totalorder %s9, 7
    %p66 = por %p64, %p65
    %p67 = scmp.ne.s32.totalorder %s59, %s62
    %p68 = scmp.eq.s32.totalorder %s9, 0
    %p69 = por %p67, %p68
    %p70 = scmp.ne.s32.totalorder %s59, %s62
    %p71 = scmp.eq.s32.totalorder %s14, 7
    %p72 = por %p70, %p71
    %p73 = scmp.ne.s32.totalorder %s62, %s63
    %p74 = scmp.eq.s32.totalorder %s14, 0
    %p75 = por %p73, %p74
    %p76 = scmp.ne.s32.totalorder %s62, %s63
    %p77 = scmp.eq.s32.totalorder %s15, 7
    %p78 = por %p76, %p77
    %p80 = scmp.ne.s32.totalorder %s63, %s79
    %p81 = scmp.eq.s32.totalorder %s15, 0
    %p82 = por %p80, %p81
    %s83 = ssub.s32 %s16, %s28
    %p84 = scmp.eq.s32.totalorder %s83, 0
    %s86 = sadd.s32 %s85, 1
    %s87 = scalar_select %p84, %s85, %s86
    %p90 = pneg %p84
    %p91 = scmp.eq.s32.totalorder %s9, 7
    %p92 = por %p90, %p91
    %p93 = scmp.ne.s32.totalorder %s85, %s88
    %p94 = scmp.eq.s32.totalorder %s9, 0
    %p95 = por %p93, %p94
    %p96 = scmp.ne.s32.totalorder %s85, %s88
    %p97 = scmp.eq.s32.totalorder %s14, 7
    %p98 = por %p96, %p97
    %p99 = scmp.ne.s32.totalorder %s88, %s89
    %p100 = scmp.eq.s32.totalorder %s14, 0
    %p101 = por %p99, %p100
    %p102 = scmp.ne.s32.totalorder %s88, %s89
    %p103 = scmp.eq.s32.totalorder %s15, 7
    %p104 = por %p102, %p103
    %p106 = scmp.ne.s32.totalorder %s89, %s105
    %p107 = scmp.eq.s32.totalorder %s15, 0
    %p108 = por %p106, %p107
    %s109 = ssub.s32 %s16, %s28
    %s110 = ssub.s32 %s17, %s24
    %s111 = sor.u32 %s109, %s110
    %p112 = scmp.eq.s32.totalorder %s111, 0
    %s114 = sadd.s32 %s113, 1
    %s115 = scalar_select %p112, %s113, %s114
    %p118 = pneg %p112
    %p119 = scmp.eq.s32.totalorder %s9, 7
    %p120 = por %p118, %p119
    %p121 = scmp.ne.s32.totalorder %s113, %s116
    %p122 = scmp.eq.s32.totalorder %s9, 0
    %p123 = por %p121, %p122
    %p124 = scmp.ne.s32.totalorder %s113, %s116
    %p125 = scmp.eq.s32.totalorder %s14, 7
    %p126 = por %p124, %p125
    %p127 = scmp.ne.s32.totalorder %s116, %s117
    %p128 = scmp.eq.s32.totalorder %s14, 0
    %p129 = por %p127, %p128
    %p130 = scmp.ne.s32.totalorder %s116, %s117
    %p131 = scmp.eq.s32.totalorder %s15, 7
    %p132 = por %p130, %p131
    %p134 = scmp.ne.s32.totalorder %s117, %s133
    %p135 = scmp.eq.s32.totalorder %s15, 0
    %p136 = por %p134, %p135
    %p137 = scmp.le.s32.totalorder 1, %s9
    %p138 = scmp.lt.s32.totalorder %s9, 9
    %p139 = pnand %p137, %p138
    %p140 = pneg %p139
    // Predicated region
    $region9: #{local_conv2d.1} parent=5 // pred_check
      _
    $region10: #{local_conv2d.1} parent=5 // pred_check_branch
      %142 = sbr.rel (%p139) target = $region12
    $region11: #{local_conv2d.1} parent=5 // pred_region
      %s143 = ssub.s32 %s9, 1
    $region12: #{local_conv2d.1} parent=5 // pred_fallthru
      _
    %p144 = scmp.lt.s32.totalorder %s9, 8
    // Predicated region
    $region13: #{local_conv2d.1} parent=5 // pred_check
      %p145 = pneg %p144
    $region14: #{local_conv2d.1} parent=5 // pred_check_branch
      %147 = sbr.rel (%p145) target = $region16
    $region15: #{local_conv2d.1} parent=5 // pred_region
      // Predicated region
      $region17: #{local_conv2d.1} parent=15 // pred_check
        %p148 = pneg %p43
      $region18: #{local_conv2d.1} parent=15 // pred_check_branch
        %150 = sbr.rel (%p148) target = $region20
      $region19: #{local_conv2d.1} parent=15 // pred_region
        %s151 = smul.u32 8, %s17
        %p152 = scmp.lt.s32.totalorder %s16, 3
        %s153 = scalar_select %p152, %s16, 3
        %p154 = scmp.lt.s32.totalorder %s151, 15
        %s155 = scalar_select %p154, %s151, 15
        %s156 = smul.addr %s153, 16
        %s157 = sadd.s32 %s155, %s156
        %s158 = smul.addr %s157, 4
        %s159 = scalar_lea.vmem %s0, %s158
        %s160 = smul.u32 8, %s17
      $region20: #{local_conv2d.1} parent=15 // pred_fallthru
        _
      // Predicated region
      $region21: #{local_conv2d.1} parent=15 // pred_check
        %p161 = pneg %p69
      $region22: #{local_conv2d.1} parent=15 // pred_check_branch
        %163 = sbr.rel (%p161) target = $region24
      $region23: #{local_conv2d.1} parent=15 // pred_region
        %p164 = scmp.lt.s32.totalorder %s16, 3
        %s165 = scalar_select %p164, %s16, 3
        %s166 = smul.addr %s165, 16
        %s167 = smul.addr %s166, 4
        %s168 = scalar_lea.vmem %s1, %s167
      $region24: #{local_conv2d.1} parent=15 // pred_fallthru
        _
      // Predicated region
      $region25: #{local_conv2d.1} parent=15 // pred_check
        %p169 = pneg %p95
      $region26: #{local_conv2d.1} parent=15 // pred_check_branch
        %171 = sbr.rel (%p169) target = $region28
      $region27: #{local_conv2d.1} parent=15 // pred_region
        %p172 = scmp.lt.s32.totalorder %s16, 3
        %s173 = scalar_select %p172, %s16, 3
        %s174 = scalar_lea.vmem %s2, %s173
      $region28: #{local_conv2d.1} parent=15 // pred_fallthru
        _
    $region16: #{local_conv2d.1} parent=5 // pred_fallthru
      _
    %p175 = scmp.le.s32.totalorder 1, %s9
    %p176 = scmp.lt.s32.totalorder %s9, 9
    %p177 = pnand %p175, %p176
    %p178 = pneg %p177
    // Predicated region
    $region29: #{local_conv2d.1} parent=5 // pred_check
      _
    $region30: #{local_conv2d.1} parent=5 // pred_check_branch
      %180 = sbr.rel (%p177) target = $region32
    $region31: #{local_conv2d.1} parent=5 // pred_region
      %s181 = ssub.s32 %s9, 1
      %s182 = smul.u32 8, %s19
      %p183 = scmp.lt.s32.totalorder %s18, 3
      %s184 = scalar_select %p183, %s18, 3
      %p185 = scmp.lt.s32.totalorder %s182, 15
      %s186 = scalar_select %p185, %s182, 15
      %s187 = smul.addr %s184, 16
      %s188 = sadd.s32 %s186, %s187
      %s189 = smul.addr %s188, 4
      %s190 = scalar_lea.vmem %s0, %s189
      %p191 = pneg %p49
      %p192 = pneg %p46
      %p193 = scmp.lt.s32.totalorder %s18, 3
      %s194 = scalar_select %p193, %s18, 3
      %s195 = smul.addr %s194, 16
      %s196 = smul.addr %s195, 4
      %s197 = scalar_lea.vmem %s1, %s196
      %p198 = pneg %p75
      %p199 = pneg %p72
      %p200 = scmp.lt.s32.totalorder %s18, 3
      %s201 = scalar_select %p200, %s18, 3
      %s202 = scalar_lea.vmem %s2, %s201
      %p203 = pneg %p101
      %p204 = pneg %p98
      %p205 = pneg %p129
      %p206 = pneg %p126
      %s207 = smul.u32 8, %s19
      %p208 = scmp.lt.s32.totalorder %s18, 3
      %s209 = scalar_select %p208, %s18, 3
      %p210 = scmp.lt.s32.totalorder %s207, 15
      %s211 = scalar_select %p210, %s207, 15
      %s212 = smul.addr %s209, 16
      %s213 = sadd.s32 %s211, %s212
      %s214 = smul.addr %s213, 8
      %s215 = scalar_lea.vmem %s3, %s214
      %s216 = smul.u32 8, %s19
      %p217 = scmp.lt.s32.totalorder %s18, 3
      %s218 = scalar_select %p217, %s18, 3
      %p219 = scmp.lt.s32.totalorder %s216, 15
      %s220 = scalar_select %p219, %s216, 15
      %s221 = smul.addr %s218, 16
      %s222 = sadd.s32 %s220, %s221
      %s223 = smul.addr %s222, 4
      %s224 = scalar_lea.vmem %s0, %s223
      %s225 = smul.u32 8, %s19
      %p226 = scmp.lt.s32.totalorder %s18, 3
      %s227 = scalar_select %p226, %s18, 3
      %s228 = smul.addr %s227, 16
      %s229 = smul.addr %s228, 4
      %s230 = scalar_lea.vmem %s1, %s229
      %p231 = scmp.lt.s32.totalorder %s18, 3
      %s232 = scalar_select %p231, %s18, 3
      %s233 = scalar_lea.vmem %s2, %s232
      %s234 = smul.u32 8, %s19
      %p235 = scmp.lt.s32.totalorder %s18, 3
      %s236 = scalar_select %p235, %s18, 3
      %p237 = scmp.lt.s32.totalorder %s234, 15
      %s238 = scalar_select %p237, %s234, 15
      %s239 = smul.addr %s236, 16
      %s240 = sadd.s32 %s238, %s239
      %s241 = smul.addr %s240, 8
      %s242 = scalar_lea.vmem %s3, %s241
      %s243 = smul.u32 8, %s19
      %v245 = vld [vmem:[%s224] sm:$0xf]
      %v246 = vld [vmem:[%s224 + $0x4] sm:$0xf]
      %v247 = vld [vmem:[%s224 + $0x8] sm:$0xf]
      %v248 = vld [vmem:[%s224 + $0xc] sm:$0xf]
      %v249 = vld [vmem:[%s224 + $0x10] sm:$0xf]
      %v250 = vld [vmem:[%s224 + $0x14] sm:$0xf]
      %v251 = vld [vmem:[%s224 + $0x18] sm:$0xf]
      %v252 = vld [vmem:[%s224 + $0x1c] sm:$0xf]
      %v253 = vld [vmem:[%s230] sm:$0xf]
      %v254 = vld [vmem:[%s230 + $0x4] sm:$0xf]
      %v255 = vld [vmem:[%s230 + $0x8] sm:$0xf]
      %v256 = vld [vmem:[%s230 + $0xc] sm:$0xf]
      %v257 = vld [vmem:[%s230 + $0x10] sm:$0xf]
      %v258 = vld [vmem:[%s230 + $0x14] sm:$0xf]
      %v259 = vld [vmem:[%s230 + $0x18] sm:$0xf]
      %v260 = vld [vmem:[%s230 + $0x1c] sm:$0xf]
      %v261 = vld [vmem:[%s230 + $0x20] sm:$0xf]
      %v262 = vld [vmem:[%s230 + $0x24] sm:$0xf]
      %v263 = vld [vmem:[%s230 + $0x28] sm:$0xf]
      %v264 = vld [vmem:[%s230 + $0x2c] sm:$0xf]
      %v265 = vld [vmem:[%s230 + $0x30] sm:$0xf]
      %v266 = vld [vmem:[%s230 + $0x34] sm:$0xf]
      %v267 = vld [vmem:[%s230 + $0x38] sm:$0xf]
      %v268 = vld [vmem:[%s230 + $0x3c] sm:$0xf]
      %v269 = vld [vmem:[%s233] sm:$0x1]
      %v271 = vlaneseq
      %v272 = vshrl.u32 %v271, 7
      %v273 = vsub.s32 0, %v272
      %v274 = vrot.slane %v269, %v273
      %v284 = vunpack.c.l.b16 %v245
      %v285 = vunpack.c.l.b16 %v246
      %v286 = vunpack.c.l.b16 %v247
      %v287 = vunpack.c.l.b16 %v248
      %v288 = vunpack.c.l.b16 %v249
      %v289 = vunpack.c.l.b16 %v250
      %v290 = vunpack.c.l.b16 %v251
      %v291 = vunpack.c.l.b16 %v252
      %v292 = vpack.c.b16 %v285, %v284
      %v293 = vpack.c.b16 %v287, %v286
      %v294 = vpack.c.b16 %v289, %v288
      %v295 = vpack.c.b16 %v291, %v290
      %v316 = vunpack.c.l.b16 %v253
      %v317 = vunpack.c.l.b16 %v254
      %v318 = vunpack.c.l.b16 %v255
      %v319 = vunpack.c.l.b16 %v256
      %v320 = vunpack.c.l.b16 %v257
      %v321 = vunpack.c.l.b16 %v258
      %v322 = vunpack.c.l.b16 %v259
      %v323 = vunpack.c.l.b16 %v260
      %v324 = vunpack.c.l.b16 %v261
      %v325 = vunpack.c.l.b16 %v262
      %v326 = vunpack.c.l.b16 %v263
      %v327 = vunpack.c.l.b16 %v264
      %v328 = vunpack.c.l.b16 %v265
      %v329 = vunpack.c.l.b16 %v266
      %v330 = vunpack.c.l.b16 %v267
      %v331 = vunpack.c.l.b16 %v268
      %v332 = vpack.c.b16 %v317, %v316
      %v333 = vpack.c.b16 %v319, %v318
      %v334 = vpack.c.b16 %v321, %v320
      %v335 = vpack.c.b16 %v323, %v322
      %v336 = vpack.c.b16 %v325, %v324
      %v337 = vpack.c.b16 %v327, %v326
      %v338 = vpack.c.b16 %v329, %v328
      %v339 = vpack.c.b16 %v331, %v330
      %348 = vmatprep.subr.bf16.mxu0 0
      %349 = vmatpush1.bf16.msra.mxu0 %v332
      %350 = vmatprep.subr.bf16.mxu0 0
      %351 = vmatpush1.bf16.msra.mxu0 %v333
      %352 = vmatprep.subr.bf16.mxu0 0
      %353 = vmatpush1.bf16.msra.mxu0 %v334
      %354 = vmatprep.subr.bf16.mxu0 0
      %355 = vmatpush1.bf16.msra.mxu0 %v335
      %356 = vmatprep.subr.bf16.mxu0 0
      %357 = vmatpush1.bf16.msra.mxu0 %v336
      %358 = vmatprep.subr.bf16.mxu0 0
      %359 = vmatpush1.bf16.msra.mxu0 %v337
      %360 = vmatprep.subr.bf16.mxu0 0
      %361 = vmatpush1.bf16.msra.mxu0 %v338
      %362 = vmatprep.subr.bf16.mxu0 0
      %363 = vmatpush1.bf16.msra.mxu0 %v339
      %364 = vmatprep.subr.bf16.mxu0 0
      %365 = vmatpush1.bf16.msra.mxu0 0
      %366 = vmatprep.subr.bf16.mxu0 0
      %367 = vmatpush1.bf16.msra.mxu0 0
      %368 = vmatprep.subr.bf16.mxu0 0
      %369 = vmatpush1.bf16.msra.mxu0 0
      %370 = vmatprep.subr.bf16.mxu0 0
      %371 = vmatpush1.bf16.msra.mxu0 0
      %372 = vmatprep.subr.bf16.mxu0 0
      %373 = vmatpush1.bf16.msra.mxu0 0
      %374 = vmatprep.subr.bf16.mxu0 0
      %375 = vmatpush1.bf16.msra.mxu0 0
      %376 = vmatprep.subr.bf16.mxu0 0
      %377 = vmatpush1.bf16.msra.mxu0 0
      %378 = vmatprep.subr.bf16.mxu0 0
      %379 = vmatpush1.bf16.msra.mxu0 0
      %380 = vmatprep.mubr.bf16.mxu0 0
      %381 = vmatmul.mubr.bf16.gmra.mrb[0].mxu0 %v292
      %v382 = vpop.f32.mrb[0].mxu0
      %v383 = vadd.f32 %v274, %v382
      %v384 = vpop.f32.mrb[0].mxu0
      %v385 = vpop.f32.mrb[0].mxu0
      %v386 = vadd.f32 %v274, %v385
      %v387 = vpop.f32.mrb[0].mxu0
      %388 = vmatprep.mubr.bf16.mxu0 0
      %389 = vmatmul.mubr.bf16.gmra.mrb[0].mxu0 %v293
      %v390 = vpop.f32.mrb[0].mxu0
      %v391 = vadd.f32 %v274, %v390
      %v392 = vpop.f32.mrb[0].mxu0
      %v393 = vpop.f32.mrb[0].mxu0
      %v394 = vadd.f32 %v274, %v393
      %v395 = vpop.f32.mrb[0].mxu0
      %396 = vmatprep.mubr.bf16.mxu0 0
      %397 = vmatmul.mubr.bf16.gmra.mrb[0].mxu0 %v294
      %v398 = vpop.f32.mrb[0].mxu0
      %v399 = vadd.f32 %v274, %v398
      %v400 = vpop.f32.mrb[0].mxu0
      %v401 = vpop.f32.mrb[0].mxu0
      %v402 = vadd.f32 %v274, %v401
      %v403 = vpop.f32.mrb[0].mxu0
      %404 = vmatprep.mubr.bf16.mxu0 0
      %405 = vmatmul.mubr.bf16.gmra.mrb[0].mxu0 %v295
      %v406 = vpop.f32.mrb[0].mxu0
      %v407 = vadd.f32 %v274, %v406
      %v408 = vpop.f32.mrb[0].mxu0
      %v409 = vpop.f32.mrb[0].mxu0
      %v410 = vadd.f32 %v274, %v409
      %v411 = vpop.f32.mrb[0].mxu0
      %412 = vdwg.mxu0
      %413 = vst [vmem:[%s242] sm:$0xff] %v383
      %414 = vst [vmem:[%s242 + $0x8] sm:$0xff] %v386
      %415 = vst [vmem:[%s242 + $0x10] sm:$0xff] %v391
      %416 = vst [vmem:[%s242 + $0x18] sm:$0xff] %v394
      %417 = vst [vmem:[%s242 + $0x20] sm:$0xff] %v399
      %418 = vst [vmem:[%s242 + $0x28] sm:$0xff] %v402
      %419 = vst [vmem:[%s242 + $0x30] sm:$0xff] %v407
      %420 = vst [vmem:[%s242 + $0x38] sm:$0xff] %v410
      %s421 = smul.u32 8, %s19
      %p422 = scmp.lt.s32.totalorder %s18, 3
      %s423 = scalar_select %p422, %s18, 3
      %p424 = scmp.lt.s32.totalorder %s421, 15
      %s425 = scalar_select %p424, %s421, 15
      %s426 = smul.addr %s423, 16
      %s427 = sadd.s32 %s425, %s426
      %s428 = smul.addr %s427, 8
      %s429 = scalar_lea.vmem %s3, %s428
      // Predicated region
      $region33: #{local_conv2d.1} parent=31 // pred_check
        %p430 = pneg %p126
      $region34: #{local_conv2d.1} parent=31 // pred_check_branch
        %432 = sbr.rel (%p430) target = $region36
      $region35: #{local_conv2d.1} parent=31 // pred_region
        %s433 = smul.u32 8, %s19
      $region36: #{local_conv2d.1} parent=31 // pred_fallthru
        _
    $region32: #{local_conv2d.1} parent=5 // pred_fallthru
      _
    %p434 = scmp.le.s32.totalorder 2, %s9
    // Predicated region
    $region37: #{local_conv2d.1} parent=5 // pred_check
      %p435 = pneg %p434
    $region38: #{local_conv2d.1} parent=5 // pred_check_branch
      %437 = sbr.rel (%p435) target = $region40
    $region39: #{local_conv2d.1} parent=5 // pred_region
      %s438 = ssub.s32 %s9, 2
      // Predicated region
      $region41: #{local_conv2d.1} parent=39 // pred_check
        %p439 = pneg %p132
      $region42: #{local_conv2d.1} parent=39 // pred_check_branch
        %441 = sbr.rel (%p439) target = $region44
      $region43: #{local_conv2d.1} parent=39 // pred_region
        %s442 = smul.u32 8, %s21
        %p443 = scmp.lt.s32.totalorder %s20, 3
        %s444 = scalar_select %p443, %s20, 3
        %p445 = scmp.lt.s32.totalorder %s442, 15
        %s446 = scalar_select %p445, %s442, 15
        %s447 = smul.addr %s444, 16
        %s448 = sadd.s32 %s446, %s447
        %s449 = smul.addr %s448, 8
        %s450 = scalar_lea.vmem %s3, %s449
      $region44: #{local_conv2d.1} parent=39 // pred_fallthru
        _
    $region40: #{local_conv2d.1} parent=5 // pred_fallthru
      _
  $region6: #{local_conv2d.1} parent=0 // loop_footer
    %s13 = sadd.s32 1, %s9
  $region7: #{local_conv2d.1} parent=0 // loop_footer_branch
    %8 = sbr.rel target = $region3
  $region8: #{local_conv2d.1} parent=0 // loop_exit
    _

</llo_original>
